<compile_context>
chip_gen: v7x
topology: tpu7x:2x2x1
jax: 0.10.0
libtpu: 0.0.40
codegen_flags: <defaults>
</compile_context>

<pallas_src>
import jax
import jax.numpy as jnp
from jax.experimental import pallas as pl
from jax.experimental.pallas import tpu as pltpu


def splitnet_kernel(
    x_ref,
    w2_ref, g2_ref, be2_ref,
    w3_ref, g3_ref, be3_ref,
    w6_ref, b6_ref,
    o_ref,
):
    eps = 1e-5

    def bn_sigmoid(h, gamma, beta):
        # Training-mode BatchNorm1d folded to one scale/shift, then sigmoid.
        mean = jnp.mean(h, axis=0, keepdims=True)                 # XLU reduce
        var = jnp.maximum(
            jnp.mean(h * h, axis=0, keepdims=True) - mean * mean, 0.0
        )
        scale = gamma * jax.lax.rsqrt(var + eps)                  # EUP rsqrt
        shift = beta - mean * scale
        return jax.nn.sigmoid(h * scale + shift)                  # EUP exp

    x = x_ref[...]                                                # (B, F) f32

    # fc2 -> batch2 -> sigmoid   (bias cancelled by BN mean subtraction)
    h = jnp.dot(x, w2_ref[...], preferred_element_type=jnp.float32)
    h = bn_sigmoid(h, g2_ref[...], be2_ref[...])

    # fc3 -> batch3 -> sigmoid   (bias cancelled by BN mean subtraction)
    h = jnp.dot(h, w3_ref[...], preferred_element_type=jnp.float32)
    h = bn_sigmoid(h, g3_ref[...], be3_ref[...])

    # fc6 (lane-dense padded output: 128 lanes, real outputs in lanes 0..1)
    out = jnp.dot(h, w6_ref[...], preferred_element_type=jnp.float32) + b6_ref[...]
    o_ref[...] = out.astype(o_ref.dtype)


def splitnet_forward(x, params, n_out=2):
    B = x.shape[0]
    out_pad = params["w6"].shape[1]                # lane-dense padded width
    args = (
        x,
        params["w2"], params["g2"], params["be2"],
        params["w3"], params["g3"], params["be3"],
        params["w6"], params["b6"],
    )
    vmem = pl.BlockSpec(memory_space=pltpu.MemorySpace.VMEM)
    out = pl.pallas_call(
        splitnet_kernel,
        out_shape=jax.ShapeDtypeStruct((B, out_pad), jnp.float32),
        in_specs=[vmem] * len(args),
        out_specs=vmem,
    )(*args)
    return out[:, :n_out]                          # drop zero pad lanes (XLA)


def init_params(key, sz_feature=512, sz_embed=128, n_out=2, lane=128):
    """PyTorch-style init, stored transposed (in, out) and zero-padded to
    lane-dense widths.  Pad rows of w3/w6 are zero so padded activation lanes
    never contaminate real outputs; pad gamma=1 / beta=0 keep BN well-defined
    on zero pad columns.  fc2/fc3 biases are sampled (for the reference check)
    but never passed to the kernel — training-mode BN cancels them exactly."""
    H = sz_embed // 2                              # 64 real hidden units
    H_pad = max(lane, H)
    out_pad = max(lane, n_out)
    ks = jax.random.split(key, 6)
    s2 = 1.0 / jnp.sqrt(sz_feature)
    s3 = 1.0 / jnp.sqrt(H)

    w2 = jax.random.uniform(ks[0], (sz_feature, H), jnp.float32, -s2, s2)
    b2 = jax.random.uniform(ks[1], (H,), jnp.float32, -s2, s2)
    w3 = jax.random.uniform(ks[2], (H, H), jnp.float32, -s3, s3)
    b3 = jax.random.uniform(ks[3], (H,), jnp.float32, -s3, s3)
    w6 = jax.random.uniform(ks[4], (H, n_out), jnp.float32, -s3, s3)
    b6 = jax.random.uniform(ks[5], (1, n_out), jnp.float32, -s3, s3)

    def pad2(a, rows, cols):
        return jnp.zeros((rows, cols), jnp.float32).at[: a.shape[0], : a.shape[1]].set(a)

    params = {
        "w2": pad2(w2, sz_feature, H_pad),
        "g2": jnp.ones((1, H_pad), jnp.float32),
        "be2": jnp.zeros((1, H_pad), jnp.float32),
        "w3": pad2(w3, H_pad, H_pad),
        "g3": jnp.ones((1, H_pad), jnp.float32),
        "be3": jnp.zeros((1, H_pad), jnp.float32),
        "w6": pad2(w6, H_pad, out_pad),
        "b6": pad2(b6, 1, out_pad),
    }
    raw = {"w2": w2, "b2": b2, "w3": w3, "b3": b3, "w6": w6, "b6": b6}
    return params, raw


def reference_forward(x, raw):
    """Literal PyTorch-sequence reference (training-mode BN, with fc biases)."""
    eps = 1e-5

    def bn(h):
        mean = jnp.mean(h, axis=0, keepdims=True)
        var = jnp.mean((h - mean) ** 2, axis=0, keepdims=True)     # biased var
        return (h - mean) / jnp.sqrt(var + eps)

    h = x @ raw["w2"] + raw["b2"]
    h = jax.nn.sigmoid(bn(h))
    h = h @ raw["w3"] + raw["b3"]
    h = jax.nn.sigmoid(bn(h))
    return h @ raw["w6"] + raw["b6"]


if __name__ == "__main__":
    key = jax.random.PRNGKey(0)
    k_x, k_p = jax.random.split(key)

    B, F = 8, 512  # batch of 8 samples, 512-d features (module defaults)
    x = jax.random.normal(k_x, (B, F), jnp.float32)
    params, raw = init_params(k_p, sz_feature=F, sz_embed=128, n_out=2)

    out = splitnet_forward(x, params)
    jax.block_until_ready(out)
    assert out.shape == (B, 2)
    assert bool(jnp.all(jnp.isfinite(out)))

    ref = reference_forward(x, raw)
    assert bool(jnp.allclose(out, ref, atol=1e-3, rtol=1e-3))
    print("KERNEL_OK")
</pallas_src>

<mosaic_0001>
module attributes {stable_mosaic.version = 11 : i64} {
  func.func @splitnet_kernel(%arg0: memref<8x512xf32, #tpu.memory_space<vmem>>, %arg1: memref<512x128xf32, #tpu.memory_space<vmem>>, %arg2: memref<1x128xf32, #tpu.memory_space<vmem>>, %arg3: memref<1x128xf32, #tpu.memory_space<vmem>>, %arg4: memref<128x128xf32, #tpu.memory_space<vmem>>, %arg5: memref<1x128xf32, #tpu.memory_space<vmem>>, %arg6: memref<1x128xf32, #tpu.memory_space<vmem>>, %arg7: memref<128x128xf32, #tpu.memory_space<vmem>>, %arg8: memref<1x128xf32, #tpu.memory_space<vmem>>, %arg9: memref<8x128xf32, #tpu.memory_space<vmem>>) attributes {dimension_semantics = [], scalar_prefetch = 0 : i64, scratch_operands = 0 : i64, tpu.core_type = #tpu.core_type<tc>} {
    %c0 = arith.constant 0 : index
    %c0_0 = arith.constant 0 : index
    %0 = vector.load %arg0[%c0, %c0_0] : memref<8x512xf32, #tpu.memory_space<vmem>>, vector<8x512xf32>
    %c0_1 = arith.constant 0 : index
    %c0_2 = arith.constant 0 : index
    %1 = vector.load %arg1[%c0_1, %c0_2] : memref<512x128xf32, #tpu.memory_space<vmem>>, vector<512x128xf32>
    %cst = arith.constant dense<0.000000e+00> : vector<8x128xf32>
    %2 = tpu.matmul %0, %1, %cst {dimension_numbers = #tpu.dot_dimension_numbers<[1], [0], [0], [1], [0, 0, 1, 1], [], []>} : vector<8x512xf32>, vector<512x128xf32>, vector<8x128xf32> -> vector<8x128xf32>
    %c0_3 = arith.constant 0 : index
    %c0_4 = arith.constant 0 : index
    %3 = vector.load %arg2[%c0_3, %c0_4] : memref<1x128xf32, #tpu.memory_space<vmem>>, vector<1x128xf32>
    %c0_5 = arith.constant 0 : index
    %c0_6 = arith.constant 0 : index
    %4 = vector.load %arg3[%c0_5, %c0_6] : memref<1x128xf32, #tpu.memory_space<vmem>>, vector<1x128xf32>
    %cst_7 = arith.constant dense<0.000000e+00> : vector<128xf32>
    %5 = vector.multi_reduction <add>, %2, %cst_7 [0] : vector<8x128xf32> to vector<128xf32>
    %6 = vector.shape_cast %5 : vector<128xf32> to vector<1x128xf32>
    %cst_8 = arith.constant 8.000000e+00 : f32
    %7 = vector.broadcast %cst_8 : f32 to vector<1x128xf32>
    %8 = arith.divf %6, %7 : vector<1x128xf32>
    %9 = arith.mulf %2, %2 : vector<8x128xf32>
    %cst_9 = arith.constant dense<0.000000e+00> : vector<128xf32>
    %10 = vector.multi_reduction <add>, %9, %cst_9 [0] : vector<8x128xf32> to vector<128xf32>
    %11 = vector.shape_cast %10 : vector<128xf32> to vector<1x128xf32>
    %cst_10 = arith.constant 8.000000e+00 : f32
    %12 = vector.broadcast %cst_10 : f32 to vector<1x128xf32>
    %13 = arith.divf %11, %12 : vector<1x128xf32>
    %14 = arith.mulf %8, %8 : vector<1x128xf32>
    %15 = arith.subf %13, %14 : vector<1x128xf32>
    %cst_11 = arith.constant 0.000000e+00 : f32
    %16 = vector.broadcast %cst_11 : f32 to vector<1x128xf32>
    %17 = arith.maximumf %15, %16 : vector<1x128xf32>
    %cst_12 = arith.constant 9.99999974E-6 : f32
    %18 = vector.broadcast %cst_12 : f32 to vector<1x128xf32>
    %19 = arith.addf %17, %18 : vector<1x128xf32>
    %20 = math.rsqrt %19 : vector<1x128xf32>
    %21 = arith.mulf %3, %20 : vector<1x128xf32>
    %22 = arith.mulf %8, %21 : vector<1x128xf32>
    %23 = arith.subf %4, %22 : vector<1x128xf32>
    %24 = vector.broadcast %21 : vector<1x128xf32> to vector<8x128xf32>
    %25 = arith.mulf %2, %24 : vector<8x128xf32>
    %26 = vector.broadcast %23 : vector<1x128xf32> to vector<8x128xf32>
    %27 = arith.addf %25, %26 : vector<8x128xf32>
    %28 = arith.negf %27 : vector<8x128xf32>
    %29 = math.exp %28 : vector<8x128xf32>
    %cst_13 = arith.constant 1.000000e+00 : f32
    %30 = vector.broadcast %cst_13 : f32 to vector<8x128xf32>
    %31 = arith.addf %30, %29 : vector<8x128xf32>
    %32 = arith.divf %30, %31 : vector<8x128xf32>
    %c0_14 = arith.constant 0 : index
    %c0_15 = arith.constant 0 : index
    %33 = vector.load %arg4[%c0_14, %c0_15] : memref<128x128xf32, #tpu.memory_space<vmem>>, vector<128x128xf32>
    %cst_16 = arith.constant dense<0.000000e+00> : vector<8x128xf32>
    %34 = tpu.matmul %32, %33, %cst_16 {dimension_numbers = #tpu.dot_dimension_numbers<[1], [0], [0], [1], [0, 0, 1, 1], [], []>} : vector<8x128xf32>, vector<128x128xf32>, vector<8x128xf32> -> vector<8x128xf32>
    %c0_17 = arith.constant 0 : index
    %c0_18 = arith.constant 0 : index
    %35 = vector.load %arg5[%c0_17, %c0_18] : memref<1x128xf32, #tpu.memory_space<vmem>>, vector<1x128xf32>
    %c0_19 = arith.constant 0 : index
    %c0_20 = arith.constant 0 : index
    %36 = vector.load %arg6[%c0_19, %c0_20] : memref<1x128xf32, #tpu.memory_space<vmem>>, vector<1x128xf32>
    %cst_21 = arith.constant dense<0.000000e+00> : vector<128xf32>
    %37 = vector.multi_reduction <add>, %34, %cst_21 [0] : vector<8x128xf32> to vector<128xf32>
    %38 = vector.shape_cast %37 : vector<128xf32> to vector<1x128xf32>
    %cst_22 = arith.constant 8.000000e+00 : f32
    %39 = vector.broadcast %cst_22 : f32 to vector<1x128xf32>
    %40 = arith.divf %38, %39 : vector<1x128xf32>
    %41 = arith.mulf %34, %34 : vector<8x128xf32>
    %cst_23 = arith.constant dense<0.000000e+00> : vector<128xf32>
    %42 = vector.multi_reduction <add>, %41, %cst_23 [0] : vector<8x128xf32> to vector<128xf32>
    %43 = vector.shape_cast %42 : vector<128xf32> to vector<1x128xf32>
    %cst_24 = arith.constant 8.000000e+00 : f32
    %44 = vector.broadcast %cst_24 : f32 to vector<1x128xf32>
    %45 = arith.divf %43, %44 : vector<1x128xf32>
    %46 = arith.mulf %40, %40 : vector<1x128xf32>
    %47 = arith.subf %45, %46 : vector<1x128xf32>
    %cst_25 = arith.constant 0.000000e+00 : f32
    %48 = vector.broadcast %cst_25 : f32 to vector<1x128xf32>
    %49 = arith.maximumf %47, %48 : vector<1x128xf32>
    %cst_26 = arith.constant 9.99999974E-6 : f32
    %50 = vector.broadcast %cst_26 : f32 to vector<1x128xf32>
    %51 = arith.addf %49, %50 : vector<1x128xf32>
    %52 = math.rsqrt %51 : vector<1x128xf32>
    %53 = arith.mulf %35, %52 : vector<1x128xf32>
    %54 = arith.mulf %40, %53 : vector<1x128xf32>
    %55 = arith.subf %36, %54 : vector<1x128xf32>
    %56 = vector.broadcast %53 : vector<1x128xf32> to vector<8x128xf32>
    %57 = arith.mulf %34, %56 : vector<8x128xf32>
    %58 = vector.broadcast %55 : vector<1x128xf32> to vector<8x128xf32>
    %59 = arith.addf %57, %58 : vector<8x128xf32>
    %60 = arith.negf %59 : vector<8x128xf32>
    %61 = math.exp %60 : vector<8x128xf32>
    %cst_27 = arith.constant 1.000000e+00 : f32
    %62 = vector.broadcast %cst_27 : f32 to vector<8x128xf32>
    %63 = arith.addf %62, %61 : vector<8x128xf32>
    %64 = arith.divf %62, %63 : vector<8x128xf32>
    %c0_28 = arith.constant 0 : index
    %c0_29 = arith.constant 0 : index
    %65 = vector.load %arg7[%c0_28, %c0_29] : memref<128x128xf32, #tpu.memory_space<vmem>>, vector<128x128xf32>
    %cst_30 = arith.constant dense<0.000000e+00> : vector<8x128xf32>
    %66 = tpu.matmul %64, %65, %cst_30 {dimension_numbers = #tpu.dot_dimension_numbers<[1], [0], [0], [1], [0, 0, 1, 1], [], []>} : vector<8x128xf32>, vector<128x128xf32>, vector<8x128xf32> -> vector<8x128xf32>
    %c0_31 = arith.constant 0 : index
    %c0_32 = arith.constant 0 : index
    %67 = vector.load %arg8[%c0_31, %c0_32] : memref<1x128xf32, #tpu.memory_space<vmem>>, vector<1x128xf32>
    %68 = vector.broadcast %67 : vector<1x128xf32> to vector<8x128xf32>
    %69 = arith.addf %66, %68 : vector<8x128xf32>
    %c0_33 = arith.constant 0 : index
    %c0_34 = arith.constant 0 : index
    %70 = vector.load %arg9[%c0_33, %c0_34] : memref<8x128xf32, #tpu.memory_space<vmem>>, vector<8x128xf32>
    tpu.vector_store %arg9[%c0_33, %c0_34], %69 {strides = array<i32>} : memref<8x128xf32, #tpu.memory_space<vmem>>, vector<8x128xf32>,
    return
  }
}

</mosaic_0001>

<llo_original>
// kernel: tpu_custom_call.1
$region0: #{tpu_custom_call.1}
  #allocation0 [shape = 'u32[]', space=smem, size = 0x4, offset = 0x4, fixed_abs, tag = 'smem constant byte address 0x4 - core index']
  #allocation1 [shape = 'u32[144,128]{1,0:T(1,128)}', space=vmem, size = 0x12000, scoped, tag = 'internal scratch']
  %s0 = inlined_call_operand.hbm [shape: f32[8,512], index: 0, kind: input, shape index: {}]
  %s1 = inlined_call_operand.hbm [shape: f32[512,128], index: 1, kind: input, shape index: {}]
  %s2 = inlined_call_operand.vmem [shape: f32[1,128], index: 2, kind: input, shape index: {}]
  %s3 = inlined_call_operand.vmem [shape: f32[1,128], index: 3, kind: input, shape index: {}]
  %s4 = inlined_call_operand.hbm [shape: f32[128,128], index: 4, kind: input, shape index: {}]
  %s5 = inlined_call_operand.vmem [shape: f32[1,128], index: 5, kind: input, shape index: {}]
  %s6 = inlined_call_operand.vmem [shape: f32[1,128], index: 6, kind: input, shape index: {}]
  %s7 = inlined_call_operand.hbm [shape: f32[128,128], index: 7, kind: input, shape index: {}]
  %s8 = inlined_call_operand.vmem [shape: f32[1,128], index: 8, kind: input, shape index: {}]
  %s9 = inlined_call_operand.hbm [shape: f32[8,128], index: 9, kind: output, shape index: {}]
  %s10 = sld [smem:[#allocation0]]
  $region62: #{tpu_custom_call.1} parent=0
    _
  %s12 = ssub.s32 1, %s10
  %s13 = scalar_select 0, %s12, %s10
  $region1: #{tpu_custom_call.1} parent=0
    #allocation2 [shape = 'u8[16384]{0}', space=vmem, size = 0x4000, scoped, tag = 'input window, operand 0, single buffered']
    #allocation3 [shape = 's32[1]{0}', space=sflag, size = 0x4, scoped, tag = 'scoped memory for tpu_custom_call.1']
    #allocation4 [shape = 's32[1]{0}', space=sflag, size = 0x4, scoped, tag = 'scoped memory for tpu_custom_call.1']
    #allocation5 [shape = 'u8[262144]{0}', space=vmem, size = 0x40000, scoped, tag = 'input window, operand 1, single buffered']
    #allocation6 [shape = 's32[1]{0}', space=sflag, size = 0x4, scoped, tag = 'scoped memory for tpu_custom_call.1']
    #allocation7 [shape = 'u8[65536]{0}', space=vmem, size = 0x10000, scoped, tag = 'input window, operand 4, single buffered']
    #allocation8 [shape = 'u8[65536]{0}', space=vmem, size = 0x10000, scoped, tag = 'input window, operand 7, single buffered']
    #allocation9 [shape = 's32[1]{0}', space=sflag, size = 0x4, scoped, tag = 'scoped memory for tpu_custom_call.1']
    #allocation10 [shape = 'u8[4096]{0}', space=vmem, size = 0x1000, scoped, tag = 'output window, operand 0, single buffered']
    %14 = vsyncpa [#allocation3], 0
    %15 = vsyncpa [#allocation6], 0
    %16 = vsyncpa [#allocation9], 0
    %17 = vsyncpa [#allocation4], 0
    // Predicated region
    $region2: #{tpu_custom_call.1} parent=1 // pred_check
      _
    $region3: #{tpu_custom_call.1} parent=1 // pred_check_branch
      %19 = sbr.rel (0) target = $region5
    $region4: #{tpu_custom_call.1} parent=1 // pred_region
      %s21 = ssub.s32 512, 512
      %22 = vsyncadd [#allocation3], %s21
      %s24 = sshll.u32 [#allocation2], 4
      %s25 = int_to_ptr.vmem [resolvable:$true] %s24
      %27 = dma.hbm_to_vmem [thread:$0]  %s0, 512, %s25, [#allocation3]
    $region5: #{tpu_custom_call.1} parent=1 // pred_fallthru
      _
    // Predicated region
    $region6: #{tpu_custom_call.1} parent=1 // pred_check
      _
    $region7: #{tpu_custom_call.1} parent=1 // pred_check_branch
      %29 = sbr.rel (0) target = $region9
    $region8: #{tpu_custom_call.1} parent=1 // pred_region
      %s31 = ssub.s32 8192, 8192
      %32 = vsyncadd [#allocation6], %s31
      %s33 = sshll.u32 [#allocation5], 4
      %s34 = int_to_ptr.vmem [resolvable:$true] %s33
      %39 = dma.hbm_to_vmem [thread:$0]  %s1, 8192, %s34, [#allocation6], 128, 128, 8
    $region9: #{tpu_custom_call.1} parent=1 // pred_fallthru
      _
    // Predicated region
    $region10: #{tpu_custom_call.1} parent=1 // pred_check
      _
    $region11: #{tpu_custom_call.1} parent=1 // pred_check_branch
      %41 = sbr.rel (0) target = $region13
    $region12: #{tpu_custom_call.1} parent=1 // pred_region
      _
    $region13: #{tpu_custom_call.1} parent=1 // pred_fallthru
      _
    // Predicated region
    $region14: #{tpu_custom_call.1} parent=1 // pred_check
      _
    $region15: #{tpu_custom_call.1} parent=1 // pred_check_branch
      %43 = sbr.rel (0) target = $region17
    $region16: #{tpu_custom_call.1} parent=1 // pred_region
      _
    $region17: #{tpu_custom_call.1} parent=1 // pred_fallthru
      _
    // Predicated region
    $region18: #{tpu_custom_call.1} parent=1 // pred_check
      _
    $region19: #{tpu_custom_call.1} parent=1 // pred_check_branch
      %45 = sbr.rel (0) target = $region21
    $region20: #{tpu_custom_call.1} parent=1 // pred_region
      %s47 = ssub.s32 2048, 2048
      %48 = vsyncadd [#allocation6], %s47
      %s49 = sshll.u32 [#allocation7], 4
      %s50 = int_to_ptr.vmem [resolvable:$true] %s49
      %55 = dma.hbm_to_vmem [thread:$0]  %s4, 2048, %s50, [#allocation6], 128, 128, 8
    $region21: #{tpu_custom_call.1} parent=1 // pred_fallthru
      _
    // Predicated region
    $region22: #{tpu_custom_call.1} parent=1 // pred_check
      _
    $region23: #{tpu_custom_call.1} parent=1 // pred_check_branch
      %57 = sbr.rel (0) target = $region25
    $region24: #{tpu_custom_call.1} parent=1 // pred_region
      _
    $region25: #{tpu_custom_call.1} parent=1 // pred_fallthru
      _
    // Predicated region
    $region26: #{tpu_custom_call.1} parent=1 // pred_check
      _
    $region27: #{tpu_custom_call.1} parent=1 // pred_check_branch
      %59 = sbr.rel (0) target = $region29
    $region28: #{tpu_custom_call.1} parent=1 // pred_region
      _
    $region29: #{tpu_custom_call.1} parent=1 // pred_fallthru
      _
    // Predicated region
    $region30: #{tpu_custom_call.1} parent=1 // pred_check
      _
    $region31: #{tpu_custom_call.1} parent=1 // pred_check_branch
      %61 = sbr.rel (0) target = $region33
    $region32: #{tpu_custom_call.1} parent=1 // pred_region
      %s63 = ssub.s32 2048, 2048
      %64 = vsyncadd [#allocation9], %s63
      %s65 = sshll.u32 [#allocation8], 4
      %s66 = int_to_ptr.vmem [resolvable:$true] %s65
      %71 = dma.hbm_to_vmem [thread:$0]  %s7, 2048, %s66, [#allocation9], 128, 128, 8
    $region33: #{tpu_custom_call.1} parent=1 // pred_fallthru
      _
    // Predicated region
    $region34: #{tpu_custom_call.1} parent=1 // pred_check
      _
    $region35: #{tpu_custom_call.1} parent=1 // pred_check_branch
      %73 = sbr.rel (0) target = $region37
    $region36: #{tpu_custom_call.1} parent=1 // pred_region
      _
    $region37: #{tpu_custom_call.1} parent=1 // pred_fallthru
      _
    // Predicated region
    $region38: #{tpu_custom_call.1} parent=1 // pred_check
      _
    $region39: #{tpu_custom_call.1} parent=1 // pred_check_branch
      %75 = sbr.rel (0) target = $region41
    $region40: #{tpu_custom_call.1} parent=1 // pred_region
      %76 = dma.done [#allocation3], 512
    $region41: #{tpu_custom_call.1} parent=1 // pred_fallthru
      _
    // Predicated region
    $region42: #{tpu_custom_call.1} parent=1 // pred_check
      _
    $region43: #{tpu_custom_call.1} parent=1 // pred_check_branch
      %78 = sbr.rel (0) target = $region45
    $region44: #{tpu_custom_call.1} parent=1 // pred_region
      %79 = dma.done [#allocation6], 8192
    $region45: #{tpu_custom_call.1} parent=1 // pred_fallthru
      _
    // Predicated region
    $region46: #{tpu_custom_call.1} parent=1 // pred_check
      _
    $region47: #{tpu_custom_call.1} parent=1 // pred_check_branch
      %81 = sbr.rel (0) target = $region49
    $region48: #{tpu_custom_call.1} parent=1 // pred_region
      %82 = dma.done [#allocation6], 2048
    $region49: #{tpu_custom_call.1} parent=1 // pred_fallthru
      _
    // Predicated region
    $region50: #{tpu_custom_call.1} parent=1 // pred_check
      _
    $region51: #{tpu_custom_call.1} parent=1 // pred_check_branch
      %84 = sbr.rel (0) target = $region53
    $region52: #{tpu_custom_call.1} parent=1 // pred_region
      %85 = dma.done [#allocation9], 2048
    $region53: #{tpu_custom_call.1} parent=1 // pred_fallthru
      _
    %v86 = vld [vmem:[#allocation2] sm:$0xff]
    %v87 = vld [vmem:[#allocation2 + $0x8] sm:$0xff]
    %v88 = vld [vmem:[#allocation2 + $0x10] sm:$0xff]
    %v89 = vld [vmem:[#allocation2 + $0x18] sm:$0xff]
    %v90 = vld [vmem:[#allocation5] sm:$0xff]
    %v91 = vld [vmem:[#allocation5 + $0x8] sm:$0xff]
    %v92 = vld [vmem:[#allocation5 + $0x10] sm:$0xff]
    %v93 = vld [vmem:[#allocation5 + $0x18] sm:$0xff]
    %v94 = vld [vmem:[#allocation5 + $0x20] sm:$0xff]
    %v95 = vld [vmem:[#allocation5 + $0x28] sm:$0xff]
    %v96 = vld [vmem:[#allocation5 + $0x30] sm:$0xff]
    %v97 = vld [vmem:[#allocation5 + $0x38] sm:$0xff]
    %v98 = vld [vmem:[#allocation5 + $0x40] sm:$0xff]
    %v99 = vld [vmem:[#allocation5 + $0x48] sm:$0xff]
    %v100 = vld [vmem:[#allocation5 + $0x50] sm:$0xff]
    %v101 = vld [vmem:[#allocation5 + $0x58] sm:$0xff]
    %v102 = vld [vmem:[#allocation5 + $0x60] sm:$0xff]
    %v103 = vld [vmem:[#allocation5 + $0x68] sm:$0xff]
    %v104 = vld [vmem:[#allocation5 + $0x70] sm:$0xff]
    %v105 = vld [vmem:[#allocation5 + $0x78] sm:$0xff]
    %v106 = vld [vmem:[#allocation5 + $0x80] sm:$0xff]
    %v107 = vld [vmem:[#allocation5 + $0x88] sm:$0xff]
    %v108 = vld [vmem:[#allocation5 + $0x90] sm:$0xff]
    %v109 = vld [vmem:[#allocation5 + $0x98] sm:$0xff]
    %v110 = vld [vmem:[#allocation5 + $0xa0] sm:$0xff]
    %v111 = vld [vmem:[#allocation5 + $0xa8] sm:$0xff]
    %v112 = vld [vmem:[#allocation5 + $0xb0] sm:$0xff]
    %v113 = vld [vmem:[#allocation5 + $0xb8] sm:$0xff]
    %v114 = vld [vmem:[#allocation5 + $0xc0] sm:$0xff]
    %v115 = vld [vmem:[#allocation5 + $0xc8] sm:$0xff]
    %v116 = vld [vmem:[#allocation5 + $0xd0] sm:$0xff]
    %v117 = vld [vmem:[#allocation5 + $0xd8] sm:$0xff]
    %v118 = vld [vmem:[#allocation5 + $0xe0] sm:$0xff]
    %v119 = vld [vmem:[#allocation5 + $0xe8] sm:$0xff]
    %v120 = vld [vmem:[#allocation5 + $0xf0] sm:$0xff]
    %v121 = vld [vmem:[#allocation5 + $0xf8] sm:$0xff]
    %v122 = vld [vmem:[#allocation5 + $0x100] sm:$0xff]
    %v123 = vld [vmem:[#allocation5 + $0x108] sm:$0xff]
    %v124 = vld [vmem:[#allocation5 + $0x110] sm:$0xff]
    %v125 = vld [vmem:[#allocation5 + $0x118] sm:$0xff]
    %v126 = vld [vmem:[#allocation5 + $0x120] sm:$0xff]
    %v127 = vld [vmem:[#allocation5 + $0x128] sm:$0xff]
    %v128 = vld [vmem:[#allocation5 + $0x130] sm:$0xff]
    %v129 = vld [vmem:[#allocation5 + $0x138] sm:$0xff]
    %v130 = vld [vmem:[#allocation5 + $0x140] sm:$0xff]
    %v131 = vld [vmem:[#allocation5 + $0x148] sm:$0xff]
    %v132 = vld [vmem:[#allocation5 + $0x150] sm:$0xff]
    %v133 = vld [vmem:[#allocation5 + $0x158] sm:$0xff]
    %v134 = vld [vmem:[#allocation5 + $0x160] sm:$0xff]
    %v135 = vld [vmem:[#allocation5 + $0x168] sm:$0xff]
    %v136 = vld [vmem:[#allocation5 + $0x170] sm:$0xff]
    %v137 = vld [vmem:[#allocation5 + $0x178] sm:$0xff]
    %v138 = vld [vmem:[#allocation5 + $0x180] sm:$0xff]
    %v139 = vld [vmem:[#allocation5 + $0x188] sm:$0xff]
    %v140 = vld [vmem:[#allocation5 + $0x190] sm:$0xff]
    %v141 = vld [vmem:[#allocation5 + $0x198] sm:$0xff]
    %v142 = vld [vmem:[#allocation5 + $0x1a0] sm:$0xff]
    %v143 = vld [vmem:[#allocation5 + $0x1a8] sm:$0xff]
    %v144 = vld [vmem:[#allocation5 + $0x1b0] sm:$0xff]
    %v145 = vld [vmem:[#allocation5 + $0x1b8] sm:$0xff]
    %v146 = vld [vmem:[#allocation5 + $0x1c0] sm:$0xff]
    %v147 = vld [vmem:[#allocation5 + $0x1c8] sm:$0xff]
    %v148 = vld [vmem:[#allocation5 + $0x1d0] sm:$0xff]
    %v149 = vld [vmem:[#allocation5 + $0x1d8] sm:$0xff]
    %v150 = vld [vmem:[#allocation5 + $0x1e0] sm:$0xff]
    %v151 = vld [vmem:[#allocation5 + $0x1e8] sm:$0xff]
    %v152 = vld [vmem:[#allocation5 + $0x1f0] sm:$0xff]
    %v153 = vld [vmem:[#allocation5 + $0x1f8] sm:$0xff]
    %154 = vmatprep.subr.mxu0 0.0
    %155 = vmatpush1.msra.mxu0 %v90
    %156 = vmatprep.subr.mxu0 0.0
    %157 = vmatpush1.msra.mxu0 %v91
    %158 = vmatprep.subr.mxu0 0.0
    %159 = vmatpush1.msra.mxu0 %v92
    %160 = vmatprep.subr.mxu0 0.0
    %161 = vmatpush1.msra.mxu0 %v93
    %162 = vmatprep.subr.mxu0 0.0
    %163 = vmatpush1.msra.mxu0 %v94
    %164 = vmatprep.subr.mxu0 0.0
    %165 = vmatpush1.msra.mxu0 %v95
    %166 = vmatprep.subr.mxu0 0.0
    %167 = vmatpush1.msra.mxu0 %v96
    %168 = vmatprep.subr.mxu0 0.0
    %169 = vmatpush1.msra.mxu0 %v97
    %170 = vmatprep.subr.mxu0 0.0
    %171 = vmatpush1.msra.mxu0 %v98
    %172 = vmatprep.subr.mxu0 0.0
    %173 = vmatpush1.msra.mxu0 %v99
    %174 = vmatprep.subr.mxu0 0.0
    %175 = vmatpush1.msra.mxu0 %v100
    %176 = vmatprep.subr.mxu0 0.0
    %177 = vmatpush1.msra.mxu0 %v101
    %178 = vmatprep.subr.mxu0 0.0
    %179 = vmatpush1.msra.mxu0 %v102
    %180 = vmatprep.subr.mxu0 0.0
    %181 = vmatpush1.msra.mxu0 %v103
    %182 = vmatprep.subr.mxu0 0.0
    %183 = vmatpush1.msra.mxu0 %v104
    %184 = vmatprep.subr.mxu0 0.0
    %185 = vmatpush1.msra.mxu0 %v105
    %186 = vmatprep.subr.mxu0 0.0
    %187 = vmatpush1.msra.mxu0 %v106
    %188 = vmatprep.subr.mxu0 0.0
    %189 = vmatpush1.msra.mxu0 %v107
    %190 = vmatprep.subr.mxu0 0.0
    %191 = vmatpush1.msra.mxu0 %v108
    %192 = vmatprep.subr.mxu0 0.0
    %193 = vmatpush1.msra.mxu0 %v109
    %194 = vmatprep.subr.mxu0 0.0
    %195 = vmatpush1.msra.mxu0 %v110
    %196 = vmatprep.subr.mxu0 0.0
    %197 = vmatpush1.msra.mxu0 %v111
    %198 = vmatprep.subr.mxu0 0.0
    %199 = vmatpush1.msra.mxu0 %v112
    %200 = vmatprep.subr.mxu0 0.0
    %201 = vmatpush1.msra.mxu0 %v113
    %202 = vmatprep.subr.mxu0 0.0
    %203 = vmatpush1.msra.mxu0 %v114
    %204 = vmatprep.subr.mxu0 0.0
    %205 = vmatpush1.msra.mxu0 %v115
    %206 = vmatprep.subr.mxu0 0.0
    %207 = vmatpush1.msra.mxu0 %v116
    %208 = vmatprep.subr.mxu0 0.0
    %209 = vmatpush1.msra.mxu0 %v117
    %210 = vmatprep.subr.mxu0 0.0
    %211 = vmatpush1.msra.mxu0 %v118
    %212 = vmatprep.subr.mxu0 0.0
    %213 = vmatpush1.msra.mxu0 %v119
    %214 = vmatprep.subr.mxu0 0.0
    %215 = vmatpush1.msra.mxu0 %v120
    %216 = vmatprep.subr.mxu0 0.0
    %217 = vmatpush1.msra.mxu0 %v121
    %218 = vmatprep.mubr.f32.mxu0 %v87
    %219 = vmatmul.mubr.f32.gmra.mrb[0].mxu0 %v86
    %v220 = vpop.f32.mrb[0].mxu0
    %v221 = vadd.f32 0.0, %v220
    %v222 = vpop.f32.mrb[0].mxu0
    %223 = vdwg.mxu0
    %224 = vmatprep.subr.mxu0 0.0
    %225 = vmatpush1.msra.mxu0 %v122
    %226 = vmatprep.subr.mxu0 0.0
    %227 = vmatpush1.msra.mxu0 %v123
    %228 = vmatprep.subr.mxu0 0.0
    %229 = vmatpush1.msra.mxu0 %v124
    %230 = vmatprep.subr.mxu0 0.0
    %231 = vmatpush1.msra.mxu0 %v125
    %232 = vmatprep.subr.mxu0 0.0
    %233 = vmatpush1.msra.mxu0 %v126
    %234 = vmatprep.subr.mxu0 0.0
    %235 = vmatpush1.msra.mxu0 %v127
    %236 = vmatprep.subr.mxu0 0.0
    %237 = vmatpush1.msra.mxu0 %v128
    %238 = vmatprep.subr.mxu0 0.0
    %239 = vmatpush1.msra.mxu0 %v129
    %240 = vmatprep.subr.mxu0 0.0
    %241 = vmatpush1.msra.mxu0 %v130
    %242 = vmatprep.subr.mxu0 0.0
    %243 = vmatpush1.msra.mxu0 %v131
    %244 = vmatprep.subr.mxu0 0.0
    %245 = vmatpush1.msra.mxu0 %v132
    %246 = vmatprep.subr.mxu0 0.0
    %247 = vmatpush1.msra.mxu0 %v133
    %248 = vmatprep.subr.mxu0 0.0
    %249 = vmatpush1.msra.mxu0 %v134
    %250 = vmatprep.subr.mxu0 0.0
    %251 = vmatpush1.msra.mxu0 %v135
    %252 = vmatprep.subr.mxu0 0.0
    %253 = vmatpush1.msra.mxu0 %v136
    %254 = vmatprep.subr.mxu0 0.0
    %255 = vmatpush1.msra.mxu0 %v137
    %256 = vmatprep.subr.mxu0 0.0
    %257 = vmatpush1.msra.mxu0 %v138
    %258 = vmatprep.subr.mxu0 0.0
    %259 = vmatpush1.msra.mxu0 %v139
    %260 = vmatprep.subr.mxu0 0.0
    %261 = vmatpush1.msra.mxu0 %v140
    %262 = vmatprep.subr.mxu0 0.0
    %263 = vmatpush1.msra.mxu0 %v141
    %264 = vmatprep.subr.mxu0 0.0
    %265 = vmatpush1.msra.mxu0 %v142
    %266 = vmatprep.subr.mxu0 0.0
    %267 = vmatpush1.msra.mxu0 %v143
    %268 = vmatprep.subr.mxu0 0.0
    %269 = vmatpush1.msra.mxu0 %v144
    %270 = vmatprep.subr.mxu0 0.0
    %271 = vmatpush1.msra.mxu0 %v145
    %272 = vmatprep.subr.mxu0 0.0
    %273 = vmatpush1.msra.mxu0 %v146
    %274 = vmatprep.subr.mxu0 0.0
    %275 = vmatpush1.msra.mxu0 %v147
    %276 = vmatprep.subr.mxu0 0.0
    %277 = vmatpush1.msra.mxu0 %v148
    %278 = vmatprep.subr.mxu0 0.0
    %279 = vmatpush1.msra.mxu0 %v149
    %280 = vmatprep.subr.mxu0 0.0
    %281 = vmatpush1.msra.mxu0 %v150
    %282 = vmatprep.subr.mxu0 0.0
    %283 = vmatpush1.msra.mxu0 %v151
    %284 = vmatprep.subr.mxu0 0.0
    %285 = vmatpush1.msra.mxu0 %v152
    %286 = vmatprep.subr.mxu0 0.0
    %287 = vmatpush1.msra.mxu0 %v153
    %288 = vmatprep.mubr.f32.mxu0 %v89
    %289 = vmatmul.mubr.f32.gmra.mrb[0].mxu0 %v88
    %v290 = vpop.f32.mrb[0].mxu0
    %v291 = vadd.f32 %v221, %v290
    %v292 = vpop.f32.mrb[0].mxu0
    %293 = vdwg.mxu0
    %v294 = vld [vmem:[%s2] sm:$0x1]
    %v295 = vld [vmem:[%s3] sm:$0x1]
    %v296 = vrot.slane %v291, 4
    %v297 = vadd.f32 %v291, %v296
    %v298 = vrot.slane %v297, 2
    %v299 = vadd.f32 %v297, %v298
    %v300 = vrot.slane %v299, 1
    %v301 = vadd.f32 %v299, %v300
    %v302 = vrcp.pop 8.0
    %v303 = vmul.f32 %v301, %v302
    %v304 = vmul.f32 %v291, %v291
    %v305 = vrot.slane %v304, 4
    %v306 = vadd.f32 %v304, %v305
    %v307 = vrot.slane %v306, 2
    %v308 = vadd.f32 %v306, %v307
    %v309 = vrot.slane %v308, 1
    %v310 = vadd.f32 %v308, %v309
    %v311 = vmul.f32 %v310, %v302
    %v312 = vmul.f32 %v303, %v303
    %v313 = vsub.f32 %v311, %v312
    %v314 = vmax.f32 %v313, 0.0
    %v315 = vadd.f32 %v314, 1e-05
    %v316 = vrsqrt.pop %v315
    %v317 = vmul.f32 %v294, %v316
    %v318 = vmul.f32 %v303, %v317
    %v319 = vsub.f32 %v295, %v318
    %v321 = vlaneseq
    %v322 = vshrl.u32 %v321, 7
    %v323 = vsub.s32 0, %v322
    %v324 = vrot.slane %v317, %v323
    %v326 = vmul.f32 %v291, %v324
    %v328 = vlaneseq
    %v329 = vshrl.u32 %v328, 7
    %v330 = vsub.s32 0, %v329
    %v331 = vrot.slane %v319, %v330
    %v333 = vadd.f32 %v326, %v331
    %v334 = vxor.u32 %v333, 2147483648
    %v335 = vmul.f32 %v334, 1.442695
    %v336 = vpow.pop %v335
    %v337 = vadd.f32 %v336, 1.0
    %v338 = vrcp.pop %v337
    %v339 = vmul.f32 1.0, %v338
    %v340 = vld [vmem:[#allocation7] sm:$0xff]
    %v341 = vld [vmem:[#allocation7 + $0x8] sm:$0xff]
    %v342 = vld [vmem:[#allocation7 + $0x10] sm:$0xff]
    %v343 = vld [vmem:[#allocation7 + $0x18] sm:$0xff]
    %v344 = vld [vmem:[#allocation7 + $0x20] sm:$0xff]
    %v345 = vld [vmem:[#allocation7 + $0x28] sm:$0xff]
    %v346 = vld [vmem:[#allocation7 + $0x30] sm:$0xff]
    %v347 = vld [vmem:[#allocation7 + $0x38] sm:$0xff]
    %v348 = vld [vmem:[#allocation7 + $0x40] sm:$0xff]
    %v349 = vld [vmem:[#allocation7 + $0x48] sm:$0xff]
    %v350 = vld [vmem:[#allocation7 + $0x50] sm:$0xff]
    %v351 = vld [vmem:[#allocation7 + $0x58] sm:$0xff]
    %v352 = vld [vmem:[#allocation7 + $0x60] sm:$0xff]
    %v353 = vld [vmem:[#allocation7 + $0x68] sm:$0xff]
    %v354 = vld [vmem:[#allocation7 + $0x70] sm:$0xff]
    %v355 = vld [vmem:[#allocation7 + $0x78] sm:$0xff]
    %356 = vmatprep.subr.mxu0 0.0
    %357 = vmatpush1.msra.mxu0 %v340
    %358 = vmatprep.subr.mxu0 0.0
    %359 = vmatpush1.msra.mxu0 %v341
    %360 = vmatprep.subr.mxu0 0.0
    %361 = vmatpush1.msra.mxu0 %v342
    %362 = vmatprep.subr.mxu0 0.0
    %363 = vmatpush1.msra.mxu0 %v343
    %364 = vmatprep.subr.mxu0 0.0
    %365 = vmatpush1.msra.mxu0 %v344
    %366 = vmatprep.subr.mxu0 0.0
    %367 = vmatpush1.msra.mxu0 %v345
    %368 = vmatprep.subr.mxu0 0.0
    %369 = vmatpush1.msra.mxu0 %v346
    %370 = vmatprep.subr.mxu0 0.0
    %371 = vmatpush1.msra.mxu0 %v347
    %372 = vmatprep.subr.mxu0 0.0
    %373 = vmatpush1.msra.mxu0 %v348
    %374 = vmatprep.subr.mxu0 0.0
    %375 = vmatpush1.msra.mxu0 %v349
    %376 = vmatprep.subr.mxu0 0.0
    %377 = vmatpush1.msra.mxu0 %v350
    %378 = vmatprep.subr.mxu0 0.0
    %379 = vmatpush1.msra.mxu0 %v351
    %380 = vmatprep.subr.mxu0 0.0
    %381 = vmatpush1.msra.mxu0 %v352
    %382 = vmatprep.subr.mxu0 0.0
    %383 = vmatpush1.msra.mxu0 %v353
    %384 = vmatprep.subr.mxu0 0.0
    %385 = vmatpush1.msra.mxu0 %v354
    %386 = vmatprep.subr.mxu0 0.0
    %387 = vmatpush1.msra.mxu0 %v355
    %388 = vmatprep.subr.mxu0 0.0
    %389 = vmatpush1.msra.mxu0 0.0
    %390 = vmatprep.subr.mxu0 0.0
    %391 = vmatpush1.msra.mxu0 0.0
    %392 = vmatprep.subr.mxu0 0.0
    %393 = vmatpush1.msra.mxu0 0.0
    %394 = vmatprep.subr.mxu0 0.0
    %395 = vmatpush1.msra.mxu0 0.0
    %396 = vmatprep.subr.mxu0 0.0
    %397 = vmatpush1.msra.mxu0 0.0
    %398 = vmatprep.subr.mxu0 0.0
    %399 = vmatpush1.msra.mxu0 0.0
    %400 = vmatprep.subr.mxu0 0.0
    %401 = vmatpush1.msra.mxu0 0.0
    %402 = vmatprep.subr.mxu0 0.0
    %403 = vmatpush1.msra.mxu0 0.0
    %404 = vmatprep.subr.mxu0 0.0
    %405 = vmatpush1.msra.mxu0 0.0
    %406 = vmatprep.subr.mxu0 0.0
    %407 = vmatpush1.msra.mxu0 0.0
    %408 = vmatprep.subr.mxu0 0.0
    %409 = vmatpush1.msra.mxu0 0.0
    %410 = vmatprep.subr.mxu0 0.0
    %411 = vmatpush1.msra.mxu0 0.0
    %412 = vmatprep.subr.mxu0 0.0
    %413 = vmatpush1.msra.mxu0 0.0
    %414 = vmatprep.subr.mxu0 0.0
    %415 = vmatpush1.msra.mxu0 0.0
    %416 = vmatprep.subr.mxu0 0.0
    %417 = vmatpush1.msra.mxu0 0.0
    %418 = vmatprep.subr.mxu0 0.0
    %419 = vmatpush1.msra.mxu0 0.0
    %420 = vmatprep.mubr.f32.mxu0 0.0
    %421 = vmatmul.mubr.f32.gmra.mrb[0].mxu0 %v339
    %v422 = vpop.f32.mrb[0].mxu0
    %v423 = vadd.f32 0.0, %v422
    %v424 = vpop.f32.mrb[0].mxu0
    %425 = vdwg.mxu0
    %v426 = vld [vmem:[%s5] sm:$0x1]
    %v427 = vld [vmem:[%s6] sm:$0x1]
    %v428 = vrot.slane %v423, 4
    %v429 = vadd.f32 %v423, %v428
    %v430 = vrot.slane %v429, 2
    %v431 = vadd.f32 %v429, %v430
    %v432 = vrot.slane %v431, 1
    %v433 = vadd.f32 %v431, %v432
    %v434 = vmul.f32 %v433, %v302
    %v435 = vmul.f32 %v423, %v423
    %v436 = vrot.slane %v435, 4
    %v437 = vadd.f32 %v435, %v436
    %v438 = vrot.slane %v437, 2
    %v439 = vadd.f32 %v437, %v438
    %v440 = vrot.slane %v439, 1
    %v441 = vadd.f32 %v439, %v440
    %v442 = vmul.f32 %v441, %v302
    %v443 = vmul.f32 %v434, %v434
    %v444 = vsub.f32 %v442, %v443
    %v445 = vmax.f32 %v444, 0.0
    %v446 = vadd.f32 %v445, 1e-05
    %v447 = vrsqrt.pop %v446
    %v448 = vmul.f32 %v426, %v447
    %v449 = vmul.f32 %v434, %v448
    %v450 = vsub.f32 %v427, %v449
    %v452 = vlaneseq
    %v453 = vshrl.u32 %v452, 7
    %v454 = vsub.s32 0, %v453
    %v455 = vrot.slane %v448, %v454
    %v457 = vmul.f32 %v423, %v455
    %v459 = vlaneseq
    %v460 = vshrl.u32 %v459, 7
    %v461 = vsub.s32 0, %v460
    %v462 = vrot.slane %v450, %v461
    %v464 = vadd.f32 %v457, %v462
    %v465 = vxor.u32 %v464, 2147483648
    %v466 = vmul.f32 %v465, 1.442695
    %v467 = vpow.pop %v466
    %v468 = vadd.f32 %v467, 1.0
    %v469 = vrcp.pop %v468
    %v470 = vmul.f32 1.0, %v469
    %v471 = vld [vmem:[#allocation8] sm:$0xff]
    %v472 = vld [vmem:[#allocation8 + $0x8] sm:$0xff]
    %v473 = vld [vmem:[#allocation8 + $0x10] sm:$0xff]
    %v474 = vld [vmem:[#allocation8 + $0x18] sm:$0xff]
    %v475 = vld [vmem:[#allocation8 + $0x20] sm:$0xff]
    %v476 = vld [vmem:[#allocation8 + $0x28] sm:$0xff]
    %v477 = vld [vmem:[#allocation8 + $0x30] sm:$0xff]
    %v478 = vld [vmem:[#allocation8 + $0x38] sm:$0xff]
    %v479 = vld [vmem:[#allocation8 + $0x40] sm:$0xff]
    %v480 = vld [vmem:[#allocation8 + $0x48] sm:$0xff]
    %v481 = vld [vmem:[#allocation8 + $0x50] sm:$0xff]
    %v482 = vld [vmem:[#allocation8 + $0x58] sm:$0xff]
    %v483 = vld [vmem:[#allocation8 + $0x60] sm:$0xff]
    %v484 = vld [vmem:[#allocation8 + $0x68] sm:$0xff]
    %v485 = vld [vmem:[#allocation8 + $0x70] sm:$0xff]
    %v486 = vld [vmem:[#allocation8 + $0x78] sm:$0xff]
    %v487 = vld [vmem:[%s8] sm:$0x1]
    %v489 = vlaneseq
    %v490 = vshrl.u32 %v489, 7
    %v491 = vsub.s32 0, %v490
    %v492 = vrot.slane %v487, %v491
    %494 = vmatprep.subr.mxu0 0.0
    %495 = vmatpush1.msra.mxu0 %v471
    %496 = vmatprep.subr.mxu0 0.0
    %497 = vmatpush1.msra.mxu0 %v472
    %498 = vmatprep.subr.mxu0 0.0
    %499 = vmatpush1.msra.mxu0 %v473
    %500 = vmatprep.subr.mxu0 0.0
    %501 = vmatpush1.msra.mxu0 %v474
    %502 = vmatprep.subr.mxu0 0.0
    %503 = vmatpush1.msra.mxu0 %v475
    %504 = vmatprep.subr.mxu0 0.0
    %505 = vmatpush1.msra.mxu0 %v476
    %506 = vmatprep.subr.mxu0 0.0
    %507 = vmatpush1.msra.mxu0 %v477
    %508 = vmatprep.subr.mxu0 0.0
    %509 = vmatpush1.msra.mxu0 %v478
    %510 = vmatprep.subr.mxu0 0.0
    %511 = vmatpush1.msra.mxu0 %v479
    %512 = vmatprep.subr.mxu0 0.0
    %513 = vmatpush1.msra.mxu0 %v480
    %514 = vmatprep.subr.mxu0 0.0
    %515 = vmatpush1.msra.mxu0 %v481
    %516 = vmatprep.subr.mxu0 0.0
    %517 = vmatpush1.msra.mxu0 %v482
    %518 = vmatprep.subr.mxu0 0.0
    %519 = vmatpush1.msra.mxu0 %v483
    %520 = vmatprep.subr.mxu0 0.0
    %521 = vmatpush1.msra.mxu0 %v484
    %522 = vmatprep.subr.mxu0 0.0
    %523 = vmatpush1.msra.mxu0 %v485
    %524 = vmatprep.subr.mxu0 0.0
    %525 = vmatpush1.msra.mxu0 %v486
    %526 = vmatprep.subr.mxu0 0.0
    %527 = vmatpush1.msra.mxu0 0.0
    %528 = vmatprep.subr.mxu0 0.0
    %529 = vmatpush1.msra.mxu0 0.0
    %530 = vmatprep.subr.mxu0 0.0
    %531 = vmatpush1.msra.mxu0 0.0
    %532 = vmatprep.subr.mxu0 0.0
    %533 = vmatpush1.msra.mxu0 0.0
    %534 = vmatprep.subr.mxu0 0.0
    %535 = vmatpush1.msra.mxu0 0.0
    %536 = vmatprep.subr.mxu0 0.0
    %537 = vmatpush1.msra.mxu0 0.0
    %538 = vmatprep.subr.mxu0 0.0
    %539 = vmatpush1.msra.mxu0 0.0
    %540 = vmatprep.subr.mxu0 0.0
    %541 = vmatpush1.msra.mxu0 0.0
    %542 = vmatprep.subr.mxu0 0.0
    %543 = vmatpush1.msra.mxu0 0.0
    %544 = vmatprep.subr.mxu0 0.0
    %545 = vmatpush1.msra.mxu0 0.0
    %546 = vmatprep.subr.mxu0 0.0
    %547 = vmatpush1.msra.mxu0 0.0
    %548 = vmatprep.subr.mxu0 0.0
    %549 = vmatpush1.msra.mxu0 0.0
    %550 = vmatprep.subr.mxu0 0.0
    %551 = vmatpush1.msra.mxu0 0.0
    %552 = vmatprep.subr.mxu0 0.0
    %553 = vmatpush1.msra.mxu0 0.0
    %554 = vmatprep.subr.mxu0 0.0
    %555 = vmatpush1.msra.mxu0 0.0
    %556 = vmatprep.subr.mxu0 0.0
    %557 = vmatpush1.msra.mxu0 0.0
    %558 = vmatprep.mubr.f32.mxu0 0.0
    %559 = vmatmul.mubr.f32.gmra.mrb[0].mxu0 %v470
    %v560 = vpop.f32.mrb[0].mxu0
    %v561 = vadd.f32 %v492, %v560
    %v562 = vpop.f32.mrb[0].mxu0
    %563 = vdwg.mxu0
    %564 = vst [vmem:[#allocation10] sm:$0xff] %v561
    // Predicated region
    $region54: #{tpu_custom_call.1} parent=1 // pred_check
      _
    $region55: #{tpu_custom_call.1} parent=1 // pred_check_branch
      %566 = sbr.rel (0) target = $region57
    $region56: #{tpu_custom_call.1} parent=1 // pred_region
      %s568 = ssub.s32 128, 128
      %569 = vsyncadd [#allocation4], %s568
      %s571 = sshll.u32 [#allocation10], 4
      %s572 = int_to_ptr.vmem [resolvable:$true] %s571
      %574 = dma.vmem_to_hbm [thread:$0]  %s572, 128, %s9, [#allocation4]
    $region57: #{tpu_custom_call.1} parent=1 // pred_fallthru
      _
    // Predicated region
    $region58: #{tpu_custom_call.1} parent=1 // pred_check
      _
    $region59: #{tpu_custom_call.1} parent=1 // pred_check_branch
      %576 = sbr.rel (0) target = $region61
    $region60: #{tpu_custom_call.1} parent=1 // pred_region
      %577 = dma.done [#allocation4], 128
    $region61: #{tpu_custom_call.1} parent=1 // pred_fallthru
      _
    %578 = vsyncpa [#allocation3], 1
    %579 = vsyncpa [#allocation6], 1
    %580 = vsyncpa [#allocation9], 1
    %581 = vsyncpa [#allocation4], 1

</llo_original>
